<compile_context>
chip_gen: v7x
topology: tpu7x:2x2x1
jax: 0.10.0
libtpu: 0.0.40
codegen_flags: <defaults>
</compile_context>

<pallas_src>
import jax
import jax.numpy as jnp
from jax.experimental import pallas as pl
from jax.experimental.pallas import tpu as pltpu


_LANE = 128
# Per-buffer VMEM target. With double-buffered input + output the pipelined
# footprint is ~4x this (~8 MiB), safe under the default scoped VMEM limit on
# v5e (16 MiB), v6e (32 MiB) and v7x (32 MiB) without any compiler overrides.
_MAX_BLOCK_BYTES = 2 * 1024 * 1024


def _normalize_kernel(scale_ref, bias_ref, x_ref, o_ref):
    # scale_ref / bias_ref: SMEM refs of shape (C,), float32.
    # x_ref / o_ref:        VMEM refs of shape (C, TR, L)  (N dim squeezed).
    C = x_ref.shape[0]
    for c in range(C):  # static unroll, C == 3
        xc = x_ref[c].astype(jnp.float32)
        o_ref[c] = (xc * scale_ref[c] + bias_ref[c]).astype(o_ref.dtype)


def _pick_row_tile(n_rows, n_chan, lanes, itemsize):
    """Largest legal row tile (multiple of 8, or full extent) within budget."""
    max_rows = _MAX_BLOCK_BYTES // (n_chan * lanes * itemsize)
    max_rows = max(8, (max_rows // 8) * 8)
    if n_rows <= max_rows:
        return n_rows                 # full extent is always a legal block dim
    cand = max_rows
    while cand >= 8:
        if n_rows % cand == 0:        # prefer tiles that divide evenly
            return cand
        cand -= 8
    return max_rows                   # padded last block; OOB writes are masked


def normalize(x, mean, std):
    """(x - mean[None,:,None,None]) / std[None,:,None,None], x is NCHW."""
    N, C, H, W = x.shape
    assert mean.shape == (C,) and std.shape == (C,)

    # Fold the divide into a precomputed scale/bias multiply-add.
    # Note: x*(1/s) + (-m/s) differs from (x-m)/s by ~1 ulp (documented).
    scale = (1.0 / std).astype(jnp.float32)
    bias = (-mean / std).astype(jnp.float32)

    # Lane-dense layout: flatten H*W and expose a 128-wide lane axis whenever
    # possible (e.g. 224*224 = 50176 is a multiple of 128). Reshape of a
    # contiguous NCHW array is free layout plumbing.
    HW = H * W
    if HW % _LANE == 0:
        rows, lanes = HW // _LANE, _LANE
    else:
        rows, lanes = H, W            # fallback for odd spatial shapes

    x_r = x.reshape(N, C, rows, lanes)

    tr = _pick_row_tile(rows, C, lanes, x.dtype.itemsize)
    grid = (N, pl.cdiv(rows, tr))

    out = pl.pallas_call(
        _normalize_kernel,
        out_shape=jax.ShapeDtypeStruct((N, C, rows, lanes), x.dtype),
        grid=grid,
        in_specs=[
            pl.BlockSpec(memory_space=pltpu.MemorySpace.SMEM),   # scale (C,)
            pl.BlockSpec(memory_space=pltpu.MemorySpace.SMEM),   # bias  (C,)
            pl.BlockSpec((None, C, tr, lanes), lambda n, s: (n, 0, s, 0)),
        ],
        out_specs=pl.BlockSpec((None, C, tr, lanes), lambda n, s: (n, 0, s, 0)),
        compiler_params=pltpu.CompilerParams(
            dimension_semantics=("parallel", "parallel")
        ),
    )(scale, bias, x_r)

    return out.reshape(N, C, H, W)


if __name__ == "__main__":
    # Deterministic buffers exactly as in the module's __init__.
    mean = jnp.array([0.485, 0.456, 0.406], dtype=jnp.float32)
    std = jnp.array([0.229, 0.224, 0.225], dtype=jnp.float32)

    # Small NCHW input (C must be 3 to match the module's buffers).
    key = jax.random.PRNGKey(0)
    x = jax.random.uniform(key, (2, 3, 16, 16), dtype=jnp.float32)

    out = jax.block_until_ready(normalize(x, mean, std))

    # Reference check in plain JAX (module semantics).
    ref = (x - mean.reshape(1, 3, 1, 1)) / std.reshape(1, 3, 1, 1)
    assert out.shape == x.shape and out.dtype == x.dtype
    assert jnp.allclose(out, ref, atol=1e-5, rtol=1e-5)

    print("KERNEL_OK")
</pallas_src>

<mosaic_0001>
module attributes {stable_mosaic.version = 11 : i64} {
  func.func @_normalize_kernel(%arg0: i32, %arg1: i32, %arg2: memref<3xf32, #tpu.memory_space<smem>>, %arg3: memref<3xf32, #tpu.memory_space<smem>>, %arg4: memref<1x3x2x128xf32, #tpu.memory_space<vmem>>, %arg5: memref<1x3x2x128xf32, #tpu.memory_space<vmem>>) attributes {dimension_semantics = [#tpu.dimension_semantics<parallel>, #tpu.dimension_semantics<parallel>], iteration_bounds = array<i64: 2, 1>, scalar_prefetch = 0 : i64, scratch_operands = 0 : i64, tpu.core_type = #tpu.core_type<tc>, window_params = [{transform_indices = @transform_0, window_bounds = array<i64: 3>}, {transform_indices = @transform_1, window_bounds = array<i64: 3>}, {transform_indices = @transform_2, window_bounds = array<i64: 1, 3, 2, 128>}, {transform_indices = @transform_3, window_bounds = array<i64: 1, 3, 2, 128>}]} {
    %c0 = arith.constant 0 : index
    %c0_0 = arith.constant 0 : index
    %c0_1 = arith.constant 0 : index
    %c0_2 = arith.constant 0 : index
    %0 = vector.load %arg4[%c0, %c0_0, %c0_1, %c0_2] : memref<1x3x2x128xf32, #tpu.memory_space<vmem>>, vector<1x1x2x128xf32>
    %1 = vector.shape_cast %0 : vector<1x1x2x128xf32> to vector<2x128xf32>
    %c0_3 = arith.constant 0 : index
    %2 = memref.load %arg2[%c0_3] : memref<3xf32, #tpu.memory_space<smem>>
    %3 = vector.broadcast %2 : f32 to vector<2x128xf32>
    %4 = arith.mulf %1, %3 : vector<2x128xf32>
    %c0_4 = arith.constant 0 : index
    %5 = memref.load %arg3[%c0_4] : memref<3xf32, #tpu.memory_space<smem>>
    %6 = vector.broadcast %5 : f32 to vector<2x128xf32>
    %7 = arith.addf %4, %6 : vector<2x128xf32>
    %c0_5 = arith.constant 0 : index
    %c0_6 = arith.constant 0 : index
    %c0_7 = arith.constant 0 : index
    %c0_8 = arith.constant 0 : index
    %8 = vector.load %arg5[%c0_5, %c0_6, %c0_7, %c0_8] : memref<1x3x2x128xf32, #tpu.memory_space<vmem>>, vector<1x1x2x128xf32>
    %9 = vector.shape_cast %8 : vector<1x1x2x128xf32> to vector<2x128xf32>
    %10 = vector.shape_cast %7 : vector<2x128xf32> to vector<1x1x2x128xf32>
    tpu.vector_store %arg5[%c0_5, %c0_6, %c0_7, %c0_8], %10 {strides = array<i32>} : memref<1x3x2x128xf32, #tpu.memory_space<vmem>>, vector<1x1x2x128xf32>,
    %c0_9 = arith.constant 0 : index
    %c1 = arith.constant 1 : index
    %c0_10 = arith.constant 0 : index
    %c0_11 = arith.constant 0 : index
    %11 = vector.load %arg4[%c0_9, %c1, %c0_10, %c0_11] : memref<1x3x2x128xf32, #tpu.memory_space<vmem>>, vector<1x1x2x128xf32>
    %12 = vector.shape_cast %11 : vector<1x1x2x128xf32> to vector<2x128xf32>
    %c1_12 = arith.constant 1 : index
    %13 = memref.load %arg2[%c1_12] : memref<3xf32, #tpu.memory_space<smem>>
    %14 = vector.broadcast %13 : f32 to vector<2x128xf32>
    %15 = arith.mulf %12, %14 : vector<2x128xf32>
    %c1_13 = arith.constant 1 : index
    %16 = memref.load %arg3[%c1_13] : memref<3xf32, #tpu.memory_space<smem>>
    %17 = vector.broadcast %16 : f32 to vector<2x128xf32>
    %18 = arith.addf %15, %17 : vector<2x128xf32>
    %c0_14 = arith.constant 0 : index
    %c1_15 = arith.constant 1 : index
    %c0_16 = arith.constant 0 : index
    %c0_17 = arith.constant 0 : index
    %19 = vector.load %arg5[%c0_14, %c1_15, %c0_16, %c0_17] : memref<1x3x2x128xf32, #tpu.memory_space<vmem>>, vector<1x1x2x128xf32>
    %20 = vector.shape_cast %19 : vector<1x1x2x128xf32> to vector<2x128xf32>
    %21 = vector.shape_cast %18 : vector<2x128xf32> to vector<1x1x2x128xf32>
    tpu.vector_store %arg5[%c0_14, %c1_15, %c0_16, %c0_17], %21 {strides = array<i32>} : memref<1x3x2x128xf32, #tpu.memory_space<vmem>>, vector<1x1x2x128xf32>,
    %c0_18 = arith.constant 0 : index
    %c2 = arith.constant 2 : index
    %c0_19 = arith.constant 0 : index
    %c0_20 = arith.constant 0 : index
    %22 = vector.load %arg4[%c0_18, %c2, %c0_19, %c0_20] : memref<1x3x2x128xf32, #tpu.memory_space<vmem>>, vector<1x1x2x128xf32>
    %23 = vector.shape_cast %22 : vector<1x1x2x128xf32> to vector<2x128xf32>
    %c2_21 = arith.constant 2 : index
    %24 = memref.load %arg2[%c2_21] : memref<3xf32, #tpu.memory_space<smem>>
    %25 = vector.broadcast %24 : f32 to vector<2x128xf32>
    %26 = arith.mulf %23, %25 : vector<2x128xf32>
    %c2_22 = arith.constant 2 : index
    %27 = memref.load %arg3[%c2_22] : memref<3xf32, #tpu.memory_space<smem>>
    %28 = vector.broadcast %27 : f32 to vector<2x128xf32>
    %29 = arith.addf %26, %28 : vector<2x128xf32>
    %c0_23 = arith.constant 0 : index
    %c2_24 = arith.constant 2 : index
    %c0_25 = arith.constant 0 : index
    %c0_26 = arith.constant 0 : index
    %30 = vector.load %arg5[%c0_23, %c2_24, %c0_25, %c0_26] : memref<1x3x2x128xf32, #tpu.memory_space<vmem>>, vector<1x1x2x128xf32>
    %31 = vector.shape_cast %30 : vector<1x1x2x128xf32> to vector<2x128xf32>
    %32 = vector.shape_cast %29 : vector<2x128xf32> to vector<1x1x2x128xf32>
    tpu.vector_store %arg5[%c0_23, %c2_24, %c0_25, %c0_26], %32 {strides = array<i32>} : memref<1x3x2x128xf32, #tpu.memory_space<vmem>>, vector<1x1x2x128xf32>,
    return
  }
  func.func @transform_0(%arg0: i32, %arg1: i32) -> i32 {
    %c0_i32 = arith.constant 0 : i32
    %c0_i32_0 = arith.constant 0 : i32
    return %c0_i32 : i32
  }
  func.func @transform_1(%arg0: i32, %arg1: i32) -> i32 {
    %c0_i32 = arith.constant 0 : i32
    %c0_i32_0 = arith.constant 0 : i32
    return %c0_i32 : i32
  }
  func.func @transform_2(%arg0: i32, %arg1: i32) -> (i32, i32, i32, i32) {
    %c0_i32 = arith.constant 0 : i32
    %c0_i32_0 = arith.constant 0 : i32
    %c0_i32_1 = arith.constant 0 : i32
    return %arg0, %c0_i32, %arg1, %c0_i32_0 : i32, i32, i32, i32
  }
  func.func @transform_3(%arg0: i32, %arg1: i32) -> (i32, i32, i32, i32) {
    %c0_i32 = arith.constant 0 : i32
    %c0_i32_0 = arith.constant 0 : i32
    %c0_i32_1 = arith.constant 0 : i32
    return %arg0, %c0_i32, %arg1, %c0_i32_0 : i32, i32, i32, i32
  }
}

</mosaic_0001>

<llo_original>
// kernel: tpu_custom_call.1
$region0: #{tpu_custom_call.1}
  #allocation0 [shape = 'u32[]', space=smem, size = 0x4, offset = 0x4, fixed_abs, tag = 'smem constant byte address 0x4 - core index']
  #allocation1 [shape = 'u32[144,128]{1,0:T(1,128)}', space=vmem, size = 0x12000, scoped, tag = 'internal scratch']
  %s0 = inlined_call_operand.hbm [shape: f32[3], index: 0, kind: input, shape index: {}]
  %s1 = inlined_call_operand.vmem [shape: f32[3], index: 1, kind: input, shape index: {}]
  %s2 = inlined_call_operand.hbm [shape: f32[2,3,2,128], index: 2, kind: input, shape index: {}]
  %s3 = inlined_call_operand.hbm [shape: f32[2,3,2,128], index: 3, kind: output, shape index: {}]
  %s4 = sld [smem:[#allocation0]]
  $region57: #{tpu_custom_call.1} parent=0
    _
  %s6 = ssub.s32 1, %s4
  %s7 = scalar_select 0, %s6, %s4
  $region1: #{tpu_custom_call.1} parent=0
    #allocation2 [shape = 'u8[512]{0}', space=smem, size = 0x200, scoped, tag = 'input window, operand 0, single buffered']
    #allocation3 [shape = 's32[2]{0}', space=sflag, size = 0x8, scoped, tag = 'scoped memory for tpu_custom_call.1']
    #allocation4 [shape = 's32[2]{0}', space=sflag, size = 0x8, scoped, tag = 'scoped memory for tpu_custom_call.1']
    #allocation5 [shape = 's32[2]{0}', space=sflag, size = 0x8, scoped, tag = 'scoped memory for tpu_custom_call.1']
    #allocation6 [shape = 's32[2]{0}', space=sflag, size = 0x8, scoped, tag = 'scoped memory for tpu_custom_call.1']
    #allocation7 [shape = 'u8[512]{0}', space=smem, size = 0x200, scoped, tag = 'input window, operand 1, single buffered']
    #allocation8 [shape = 'u8[6144]{0}', space=vmem, size = 0x1800, scoped, tag = 'input window, operand 2']
    #allocation9 [shape = 'u8[6144]{0}', space=vmem, size = 0x1800, scoped, tag = 'output window, operand 0']
    %8 = vsyncpa [#allocation5], 0
    %9 = vsyncpa [#allocation6], 0
    %10 = vsyncpa [#allocation3], 0
    %s11 = scalar_lea.sflag [#allocation3], 1
    %12 = vsyncpa %s11, 0
    %13 = vsyncpa [#allocation4], 0
    %s14 = scalar_lea.sflag [#allocation4], 1
    %15 = vsyncpa %s14, 0
    loop: start=0, step=1, limit=4
    $region2: #{tpu_custom_call.1} parent=1 // loop_pre_header
      _
    $region3: #{tpu_custom_call.1} parent=1 // loop_header
      %s17 = sphi 0, %s21
      %p18 = scmp.ge.s32.totalorder %s17, 4
      %s24 = sphi 0, %s36
      %s25 = sphi 0, %s32
      %s26 = sphi 0, %s24
      %s27 = sphi 0, %s25
      %s28 = sphi 0, %s26
      %s29 = sphi 0, %s27
      %s37 = sphi 0, %s37
      %s39 = sphi 0, %s37
      %s40 = sphi 0, %s39
      %s54 = sphi 0, %s40
      %s58 = sphi 0, %s58
      %s60 = sphi 0, %s58
      %s61 = sphi 0, %s60
      %s75 = sphi 0, %s61
      %s83 = sphi 0, %s85
      %s86 = sphi 0, %s83
      %s87 = sphi 0, %s86
      %s103 = sphi 0, %s87
      %s111 = sphi 0, %s113
      %s114 = sphi 0, %s111
      %s115 = sphi 0, %s114
      %s131 = sphi 0, %s115
    $region4: #{tpu_custom_call.1} parent=1 // loop_header_branch
      %20 = sbr.rel (%p18) target = $region8
    $region5: #{tpu_custom_call.1} parent=1 // loop_body
      %s22 = ssub.s32 %s17, 1
      %s23 = ssub.s32 %s17, 2
      %s30 = sadd.s32 1, %s25
      %p31 = scmp.ge.s32.totalorder %s30, 1
      %s32 = scalar_select %p31, 0, %s30
      %s33 = sadd.s32 1, %s24
      %s34 = scalar_select %p31, %s33, %s24
      %p35 = scmp.ge.s32.totalorder %s34, 2
      %s36 = scalar_select %p35, 0, %s34
      %s38 = sadd.s32 %s37, 1
      %p41 = scmp.eq.s32.totalorder %s17, 1
      %p42 = scmp.ne.s32.totalorder %s37, %s39
      %p43 = scmp.eq.s32.totalorder %s17, 0
      %p44 = por %p42, %p43
      %p45 = scmp.ne.s32.totalorder %s37, %s39
      %p46 = scmp.eq.s32.totalorder %s22, 1
      %p47 = por %p45, %p46
      %p48 = scmp.ne.s32.totalorder %s39, %s40
      %p49 = scmp.eq.s32.totalorder %s22, 0
      %p50 = por %p48, %p49
      %p51 = scmp.ne.s32.totalorder %s39, %s40
      %p52 = scmp.eq.s32.totalorder %s23, 1
      %p53 = por %p51, %p52
      %p55 = scmp.ne.s32.totalorder %s40, %s54
      %p56 = scmp.eq.s32.totalorder %s23, 0
      %p57 = por %p55, %p56
      %s59 = sadd.s32 %s58, 1
      %p62 = scmp.eq.s32.totalorder %s17, 1
      %p63 = scmp.ne.s32.totalorder %s58, %s60
      %p64 = scmp.eq.s32.totalorder %s17, 0
      %p65 = por %p63, %p64
      %p66 = scmp.ne.s32.totalorder %s58, %s60
      %p67 = scmp.eq.s32.totalorder %s22, 1
      %p68 = por %p66, %p67
      %p69 = scmp.ne.s32.totalorder %s60, %s61
      %p70 = scmp.eq.s32.totalorder %s22, 0
      %p71 = por %p69, %p70
      %p72 = scmp.ne.s32.totalorder %s60, %s61
      %p73 = scmp.eq.s32.totalorder %s23, 1
      %p74 = por %p72, %p73
      %p76 = scmp.ne.s32.totalorder %s61, %s75
      %p77 = scmp.eq.s32.totalorder %s23, 0
      %p78 = por %p76, %p77
      %s79 = ssub.s32 %s24, %s36
      %s80 = ssub.s32 %s25, %s32
      %s81 = sor.u32 %s79, %s80
      %p82 = scmp.eq.s32.totalorder %s81, 0
      %s84 = sadd.s32 %s83, 1
      %s85 = scalar_select %p82, %s83, %s84
      %p88 = pneg %p82
      %p89 = scmp.eq.s32.totalorder %s17, 1
      %p90 = por %p88, %p89
      %p91 = scmp.ne.s32.totalorder %s83, %s86
      %p92 = scmp.eq.s32.totalorder %s17, 0
      %p93 = por %p91, %p92
      %p94 = scmp.ne.s32.totalorder %s83, %s86
      %p95 = scmp.eq.s32.totalorder %s22, 1
      %p96 = por %p94, %p95
      %p97 = scmp.ne.s32.totalorder %s86, %s87
      %p98 = scmp.eq.s32.totalorder %s22, 0
      %p99 = por %p97, %p98
      %p100 = scmp.ne.s32.totalorder %s86, %s87
      %p101 = scmp.eq.s32.totalorder %s23, 1
      %p102 = por %p100, %p101
      %p104 = scmp.ne.s32.totalorder %s87, %s103
      %p105 = scmp.eq.s32.totalorder %s23, 0
      %p106 = por %p104, %p105
      %s107 = ssub.s32 %s24, %s36
      %s108 = ssub.s32 %s25, %s32
      %s109 = sor.u32 %s107, %s108
      %p110 = scmp.eq.s32.totalorder %s109, 0
      %s112 = sadd.s32 %s111, 1
      %s113 = scalar_select %p110, %s111, %s112
      %p116 = pneg %p110
      %p117 = scmp.eq.s32.totalorder %s17, 1
      %p118 = por %p116, %p117
      %p119 = scmp.ne.s32.totalorder %s111, %s114
      %p120 = scmp.eq.s32.totalorder %s17, 0
      %p121 = por %p119, %p120
      %p122 = scmp.ne.s32.totalorder %s111, %s114
      %p123 = scmp.eq.s32.totalorder %s22, 1
      %p124 = por %p122, %p123
      %p125 = scmp.ne.s32.totalorder %s114, %s115
      %p126 = scmp.eq.s32.totalorder %s22, 0
      %p127 = por %p125, %p126
      %p128 = scmp.ne.s32.totalorder %s114, %s115
      %p129 = scmp.eq.s32.totalorder %s23, 1
      %p130 = por %p128, %p129
      %p132 = scmp.ne.s32.totalorder %s115, %s131
      %p133 = scmp.eq.s32.totalorder %s23, 0
      %p134 = por %p132, %p133
      %p135 = scmp.le.s32.totalorder 1, %s17
      %p136 = scmp.lt.s32.totalorder %s17, 3
      %p137 = pnand %p135, %p136
      %p138 = pneg %p137
      // Predicated region
      $region9: #{tpu_custom_call.1} parent=5 // pred_check
        _
      $region10: #{tpu_custom_call.1} parent=5 // pred_check_branch
        %140 = sbr.rel (%p137) target = $region12
      $region11: #{tpu_custom_call.1} parent=5 // pred_region
        %s141 = ssub.s32 %s17, 1
        // Predicated region
        $region13: #{tpu_custom_call.1} parent=11 // pred_check
          %p142 = pneg %p50
        $region14: #{tpu_custom_call.1} parent=11 // pred_check_branch
          %144 = sbr.rel (%p142) target = $region16
        $region15: #{tpu_custom_call.1} parent=11 // pred_region
          %s146 = ssub.s32 16, 16
          %147 = vsyncadd [#allocation5], %s146
          %150 = dma.hbm_to_smem %s0, 16, [#allocation2], [#allocation5]
        $region16: #{tpu_custom_call.1} parent=11 // pred_fallthru
          _
        // Predicated region
        $region17: #{tpu_custom_call.1} parent=11 // pred_check
          %p151 = pneg %p71
        $region18: #{tpu_custom_call.1} parent=11 // pred_check_branch
          %153 = sbr.rel (%p151) target = $region20
        $region19: #{tpu_custom_call.1} parent=11 // pred_region
          %s155 = ssub.s32 16, 16
          %156 = vsyncadd [#allocation6], %s155
          %s158 = sshll.u32 %s1, 4
          %s159 = int_to_ptr.vmem [resolvable:$true] %s158
          %161 = dma.vmem_to_smem %s159, 16, [#allocation7], [#allocation6]
        $region20: #{tpu_custom_call.1} parent=11 // pred_fallthru
          _
      $region12: #{tpu_custom_call.1} parent=5 // pred_fallthru
        _
      %p162 = scmp.lt.s32.totalorder %s17, 2
      // Predicated region
      $region21: #{tpu_custom_call.1} parent=5 // pred_check
        %p163 = pneg %p162
      $region22: #{tpu_custom_call.1} parent=5 // pred_check_branch
        %165 = sbr.rel (%p163) target = $region24
      $region23: #{tpu_custom_call.1} parent=5 // pred_region
        // Predicated region
        $region25: #{tpu_custom_call.1} parent=23 // pred_check
          %p166 = pneg %p93
        $region26: #{tpu_custom_call.1} parent=23 // pred_check_branch
          %168 = sbr.rel (%p166) target = $region28
        $region27: #{tpu_custom_call.1} parent=23 // pred_region
          %s169 = sand.u32 %s83, 1
          %s170 = scalar_lea.sflag [#allocation3], %s169
          %s171 = sand.u32 %s83, 1
          %s172 = smul.addr %s171, 6
          %s173 = scalar_lea.vmem [#allocation8], %s172
          %s175 = ssub.s32 96, 96
          %176 = vsyncadd %s170, %s175
          %s177 = smul.addr %s24, 3
          %s178 = sadd.s32 %s25, %s177
          %s179 = smul.addr %s178, 32
          %s180 = scalar_lea.hbm %s2, %s179
          %s181 = sshll.u32 %s173, 4
          %s182 = int_to_ptr.vmem [resolvable:$true] %s181
          %187 = dma.hbm_to_vmem [thread:$0]  %s180, 96, %s182, %s170, 32, 32, 2
        $region28: #{tpu_custom_call.1} parent=23 // pred_fallthru
          _
      $region24: #{tpu_custom_call.1} parent=5 // pred_fallthru
        _
      %p188 = scmp.le.s32.totalorder 1, %s17
      %p189 = scmp.lt.s32.totalorder %s17, 3
      %p190 = pnand %p188, %p189
      %p191 = pneg %p190
      // Predicated region
      $region29: #{tpu_custom_call.1} parent=5 // pred_check
        _
      $region30: #{tpu_custom_call.1} parent=5 // pred_check_branch
        %193 = sbr.rel (%p190) target = $region32
      $region31: #{tpu_custom_call.1} parent=5 // pred_region
        %s194 = ssub.s32 %s17, 1
        // Predicated region
        $region33: #{tpu_custom_call.1} parent=31 // pred_check
          %p195 = pneg %p50
        $region34: #{tpu_custom_call.1} parent=31 // pred_check_branch
          %197 = sbr.rel (%p195) target = $region36
        $region35: #{tpu_custom_call.1} parent=31 // pred_region
          %198 = dma.done [#allocation5], 16
        $region36: #{tpu_custom_call.1} parent=31 // pred_fallthru
          _
        // Predicated region
        $region37: #{tpu_custom_call.1} parent=31 // pred_check
          %p199 = pneg %p71
        $region38: #{tpu_custom_call.1} parent=31 // pred_check_branch
          %201 = sbr.rel (%p199) target = $region40
        $region39: #{tpu_custom_call.1} parent=31 // pred_region
          %202 = dma.done [#allocation6], 16
        $region40: #{tpu_custom_call.1} parent=31 // pred_fallthru
          _
        %s203 = sand.u32 %s86, 1
        %s204 = scalar_lea.sflag [#allocation3], %s203
        %s205 = sand.u32 %s86, 1
        %s206 = smul.addr %s205, 6
        %s207 = scalar_lea.vmem [#allocation8], %s206
        // Predicated region
        $region41: #{tpu_custom_call.1} parent=31 // pred_check
          %p208 = pneg %p99
        $region42: #{tpu_custom_call.1} parent=31 // pred_check_branch
          %210 = sbr.rel (%p208) target = $region44
        $region43: #{tpu_custom_call.1} parent=31 // pred_region
          %211 = dma.done %s204, 96
        $region44: #{tpu_custom_call.1} parent=31 // pred_fallthru
          _
        %212 = sfence
        %p213 = pneg %p50
        %p214 = pneg %p47
        %p215 = pneg %p71
        %p216 = pneg %p68
        %s217 = sand.u32 %s86, 1
        %s218 = scalar_lea.sflag [#allocation3], %s217
        %s219 = sand.u32 %s86, 1
        %s220 = smul.addr %s219, 6
        %s221 = scalar_lea.vmem [#allocation8], %s220
        %p222 = pneg %p99
        %p223 = pneg %p96
        %p224 = pneg %p127
        %p225 = pneg %p124
        %s226 = sand.u32 %s114, 1
        %s227 = scalar_lea.sflag [#allocation4], %s226
        %s228 = sand.u32 %s114, 1
        %s229 = smul.addr %s228, 6
        %s230 = scalar_lea.vmem [#allocation9], %s229
        %v231 = vld [vmem:[%s207] sm:$0x3]
        %s232 = sld [smem:[#allocation2]]
        %v233 = vstv %s232
        %v234 = vmul.f32 %v231, %v233
        %s235 = sld [smem:[#allocation7]]
        %v236 = vstv %s235
        %v237 = vadd.f32 %v234, %v236
        %238 = vst [vmem:[%s230] sm:$0x3] %v237
        %s239 = scalar_lea.vmem %s207, 2 [#allocation8]
        %v240 = vld [vmem:[%s239] sm:$0x3]
        %s241 = sld [smem:[#allocation2 + $0x1]]
        %v242 = vstv %s241
        %v243 = vmul.f32 %v240, %v242
        %s244 = sld [smem:[#allocation7 + $0x1]]
        %v245 = vstv %s244
        %v246 = vadd.f32 %v243, %v245
        %s247 = scalar_lea.vmem %s230, 2 [#allocation9]
        %248 = vst [vmem:[%s247] sm:$0x3] %v246
        %s249 = scalar_lea.vmem %s207, 4 [#allocation8]
        %v250 = vld [vmem:[%s249] sm:$0x3]
        %s251 = sld [smem:[#allocation2 + $0x2]]
        %v252 = vstv %s251
        %v253 = vmul.f32 %v250, %v252
        %s254 = sld [smem:[#allocation7 + $0x2]]
        %v255 = vstv %s254
        %v256 = vadd.f32 %v253, %v255
        %s257 = scalar_lea.vmem %s230, 4 [#allocation9]
        %258 = vst [vmem:[%s257] sm:$0x3] %v256
        %s259 = sand.u32 %s114, 1
        %s260 = scalar_lea.sflag [#allocation4], %s259
        %s261 = sand.u32 %s114, 1
        %s262 = smul.addr %s261, 6
        %s263 = scalar_lea.vmem [#allocation9], %s262
        // Predicated region
        $region45: #{tpu_custom_call.1} parent=31 // pred_check
          %p264 = pneg %p124
        $region46: #{tpu_custom_call.1} parent=31 // pred_check_branch
          %266 = sbr.rel (%p264) target = $region48
        $region47: #{tpu_custom_call.1} parent=31 // pred_region
          %s268 = ssub.s32 96, 96
          %269 = vsyncadd %s260, %s268
          %s270 = smul.addr %s26, 3
          %s271 = sadd.s32 %s27, %s270
          %s272 = smul.addr %s271, 32
          %s273 = scalar_lea.hbm %s3, %s272
          %s274 = sshll.u32 %s263, 4
          %s275 = int_to_ptr.vmem [resolvable:$true] %s274
          %280 = dma.vmem_to_hbm [thread:$0]  %s275, 96, %s273, %s260, 32, 32, 2
        $region48: #{tpu_custom_call.1} parent=31 // pred_fallthru
          _
      $region32: #{tpu_custom_call.1} parent=5 // pred_fallthru
        _
      %p281 = scmp.le.s32.totalorder 2, %s17
      // Predicated region
      $region49: #{tpu_custom_call.1} parent=5 // pred_check
        %p282 = pneg %p281
      $region50: #{tpu_custom_call.1} parent=5 // pred_check_branch
        %284 = sbr.rel (%p282) target = $region52
      $region51: #{tpu_custom_call.1} parent=5 // pred_region
        %s285 = ssub.s32 %s17, 2
        // Predicated region
        $region53: #{tpu_custom_call.1} parent=51 // pred_check
          %p286 = pneg %p130
        $region54: #{tpu_custom_call.1} parent=51 // pred_check_branch
          %288 = sbr.rel (%p286) target = $region56
        $region55: #{tpu_custom_call.1} parent=51 // pred_region
          %s289 = sand.u32 %s115, 1
          %s290 = scalar_lea.sflag [#allocation4], %s289
          %s291 = sand.u32 %s115, 1
          %s292 = smul.addr %s291, 6
          %s293 = scalar_lea.vmem [#allocation9], %s292
          %294 = dma.done %s290, 96
        $region56: #{tpu_custom_call.1} parent=51 // pred_fallthru
          _
      $region52: #{tpu_custom_call.1} parent=5 // pred_fallthru
        _
    $region6: #{tpu_custom_call.1} parent=1 // loop_footer
      %s21 = sadd.s32 1, %s17
    $region7: #{tpu_custom_call.1} parent=1 // loop_footer_branch
      %16 = sbr.rel target = $region3
    $region8: #{tpu_custom_call.1} parent=1 // loop_exit
      _
    %295 = vsyncpa [#allocation3], 1
    %s296 = scalar_lea.sflag [#allocation3], 1
    %297 = vsyncpa %s296, 1
    %298 = vsyncpa [#allocation4], 1
    %s299 = scalar_lea.sflag [#allocation4], 1
    %300 = vsyncpa %s299, 1
    %301 = vsyncpa [#allocation5], 1
    %s302 = scalar_lea.sflag [#allocation5], 1
    %303 = vsyncpa %s302, 1
    %304 = vsyncpa [#allocation6], 1
    %s305 = scalar_lea.sflag [#allocation6], 1
    %306 = vsyncpa %s305, 1

</llo_original>
